<compile_context>
chip_gen: v7x
topology: tpu7x:2x2x1
jax: 0.10.0
libtpu: 0.0.40
codegen_flags: <defaults>
</compile_context>

<pallas_src>
import jax
import jax.numpy as jnp
from jax.experimental import pallas as pl
from jax.experimental.pallas import tpu as pltpu

HIDDEN = 32


def _leaky_relu(x, slope=0.2):
    return jnp.where(x > 0, x, slope * x)


def discriminator_kernel(xT_ref,
                         w1T_ref, b1_ref,
                         w2T_ref, b2_ref,
                         w3T_ref, b3_ref,
                         w4T_ref, b4_ref,
                         o_ref):
    # xT_ref: (sign_dim, Bt) -- batch on the lane axis.
    xT = xT_ref[...].astype(jnp.bfloat16)

    # Layer 1: (32, sign_dim) @ (sign_dim, Bt) -> (32, Bt), f32 accumulation.
    h = jnp.dot(w1T_ref[...], xT, preferred_element_type=jnp.float32)
    h = _leaky_relu(h + b1_ref[...])
    # Dropout(0.5): identity in eval mode.

    h = jnp.dot(w2T_ref[...], h.astype(jnp.bfloat16),
                preferred_element_type=jnp.float32)
    h = _leaky_relu(h + b2_ref[...])

    h = jnp.dot(w3T_ref[...], h.astype(jnp.bfloat16),
                preferred_element_type=jnp.float32)
    h = _leaky_relu(h + b3_ref[...])

    out = jnp.dot(w4T_ref[...], h.astype(jnp.bfloat16),
                  preferred_element_type=jnp.float32) + b4_ref[...]
    # (1, Bt): lane-dense, unmasked vst writeback.
    o_ref[...] = out.astype(o_ref.dtype)


def _default_batch_tile(B):
    # Prefer a lane-aligned tile giving grid >= 2 (pipelining + both v7x TCs);
    # fall back to a single full-batch tile for tiny batches.
    for cand in (512, 256, 128):
        if B % cand == 0 and B // cand >= 2:
            return cand
    return B


def discriminator_forward(x, params, *, batch_tile=None):
    """x: (B, sign_dim) float32.  params: dict of (in,out) weights + (1,out) biases.

    Returns (B, 1), matching the PyTorch Discriminator forward (eval mode)."""
    B, sign_dim = x.shape
    if batch_tile is None:
        batch_tile = _default_batch_tile(B)
    if batch_tile != B:
        assert B % batch_tile == 0, "batch must divide evenly into tiles"
        assert batch_tile % 128 == 0, "lane-axis batch tile must be a multiple of 128"

    # Transposed, MXU-friendly parameter layout (computed once per call; under
    # jit these transposes/casts are fused away).
    xT = x.T                                                  # (sign_dim, B)
    w1T = params["w1"].T.astype(jnp.bfloat16)                 # (32, sign_dim)
    w2T = params["w2"].T.astype(jnp.bfloat16)                 # (32, 32)
    w3T = params["w3"].T.astype(jnp.bfloat16)                 # (32, 32)
    w4T = params["w4"].T.astype(jnp.bfloat16)                 # (1, 32)
    b1 = params["b1"].reshape(-1, 1).astype(jnp.float32)      # (32, 1)
    b2 = params["b2"].reshape(-1, 1).astype(jnp.float32)
    b3 = params["b3"].reshape(-1, 1).astype(jnp.float32)
    b4 = params["b4"].reshape(-1, 1).astype(jnp.float32)      # (1, 1)

    full = lambda arr: pl.BlockSpec(arr.shape, lambda i: (0, 0))

    flops = 2 * B * (sign_dim * HIDDEN + 2 * HIDDEN * HIDDEN + HIDDEN * 1)
    bytes_accessed = (x.size * x.dtype.itemsize + B * 4
                      + sum(w.size * 2 for w in (w1T, w2T, w3T, w4T))
                      + sum(b.size * 4 for b in (b1, b2, b3, b4)))

    yT = pl.pallas_call(
        discriminator_kernel,
        out_shape=jax.ShapeDtypeStruct((1, B), x.dtype),
        grid_spec=pltpu.PrefetchScalarGridSpec(
            num_scalar_prefetch=0,
            grid=(B // batch_tile,),
            in_specs=[
                pl.BlockSpec((sign_dim, batch_tile), lambda i: (0, i)),  # xT tile
                full(w1T), full(b1),
                full(w2T), full(b2),
                full(w3T), full(b3),
                full(w4T), full(b4),
            ],
            out_specs=pl.BlockSpec((1, batch_tile), lambda i: (0, i)),
        ),
        compiler_params=pltpu.CompilerParams(
            dimension_semantics=("parallel",)),
        cost_estimate=pl.CostEstimate(
            flops=flops, transcendentals=0, bytes_accessed=bytes_accessed),
    )(xT, w1T, b1, w2T, b2, w3T, b3, w4T, b4)

    return yT.T                                               # (B, 1)


def init_params(key, sign_dim, hidden=HIDDEN):
    """Deterministic synthetic init (uniform, PyTorch-Linear-style bounds)."""
    dims = [(sign_dim, hidden), (hidden, hidden), (hidden, hidden), (hidden, 1)]
    params = {}
    for idx, (fan_in, fan_out) in enumerate(dims, start=1):
        key, kw, kb = jax.random.split(key, 3)
        bound = 1.0 / jnp.sqrt(jnp.float32(fan_in))
        params[f"w{idx}"] = jax.random.uniform(
            kw, (fan_in, fan_out), jnp.float32, -bound, bound)
        params[f"b{idx}"] = jax.random.uniform(
            kb, (1, fan_out), jnp.float32, -bound, bound)
    return params


def discriminator_reference(x, params):
    h = x
    for i in (1, 2, 3):
        h = h @ params[f"w{i}"] + params[f"b{i}"]
        h = jnp.where(h > 0, h, 0.2 * h)
    return h @ params["w4"] + params["b4"]


if __name__ == "__main__":
    key = jax.random.PRNGKey(0)
    k_param, k_x, k_x2 = jax.random.split(key, 3)

    sign_dim = 16
    params = init_params(k_param, sign_dim)

    # Tiled path: batch=256 -> batch_tile=128 -> grid=(2,) parallel lane tiles.
    batch = 256
    x = jax.random.normal(k_x, (batch, sign_dim), jnp.float32)
    out = jax.block_until_ready(discriminator_forward(x, params))
    ref = discriminator_reference(x, params)
    assert out.shape == (batch, 1)
    assert bool(jnp.all(jnp.isfinite(out)))
    # bf16 MXU inputs / f32 accumulation -> bf16-scale tolerance vs f32 reference.
    assert jnp.allclose(out, ref, atol=2e-2, rtol=2e-2), "mismatch vs reference"

    # Small-batch fallback path (batch_tile == B, single grid step).
    x_small = jax.random.normal(k_x2, (8, sign_dim), jnp.float32)
    out_small = jax.block_until_ready(discriminator_forward(x_small, params))
    ref_small = discriminator_reference(x_small, params)
    assert out_small.shape == (8, 1)
    assert jnp.allclose(out_small, ref_small, atol=2e-2, rtol=2e-2), "mismatch (small batch)"

    print("KERNEL_OK")
</pallas_src>

<mosaic_0001>
module attributes {stable_mosaic.version = 11 : i64} {
  func.func @discriminator_kernel(%arg0: i32, %arg1: memref<16x128xf32, #tpu.memory_space<vmem>>, %arg2: memref<32x16xbf16, #tpu.memory_space<vmem>>, %arg3: memref<32x1xf32, #tpu.memory_space<vmem>>, %arg4: memref<32x32xbf16, #tpu.memory_space<vmem>>, %arg5: memref<32x1xf32, #tpu.memory_space<vmem>>, %arg6: memref<32x32xbf16, #tpu.memory_space<vmem>>, %arg7: memref<32x1xf32, #tpu.memory_space<vmem>>, %arg8: memref<1x32xbf16, #tpu.memory_space<vmem>>, %arg9: memref<1x1xf32, #tpu.memory_space<vmem>>, %arg10: memref<1x128xf32, #tpu.memory_space<vmem>>) attributes {dimension_semantics = [#tpu.dimension_semantics<parallel>], iteration_bounds = array<i64: 2>, scalar_prefetch = 0 : i64, scratch_operands = 0 : i64, tpu.core_type = #tpu.core_type<tc>, window_params = [{transform_indices = @transform_0, window_bounds = array<i64: 16, 128>}, {pipeline_mode = #tpu.pipeline_mode<synchronous>, transform_indices = @transform_1, window_bounds = array<i64: 32, 16>}, {pipeline_mode = #tpu.pipeline_mode<synchronous>, transform_indices = @transform_2, window_bounds = array<i64: 32, 1>}, {pipeline_mode = #tpu.pipeline_mode<synchronous>, transform_indices = @transform_3, window_bounds = array<i64: 32, 32>}, {pipeline_mode = #tpu.pipeline_mode<synchronous>, transform_indices = @transform_4, window_bounds = array<i64: 32, 1>}, {pipeline_mode = #tpu.pipeline_mode<synchronous>, transform_indices = @transform_5, window_bounds = array<i64: 32, 32>}, {pipeline_mode = #tpu.pipeline_mode<synchronous>, transform_indices = @transform_6, window_bounds = array<i64: 32, 1>}, {pipeline_mode = #tpu.pipeline_mode<synchronous>, transform_indices = @transform_7, window_bounds = array<i64: 1, 32>}, {pipeline_mode = #tpu.pipeline_mode<synchronous>, transform_indices = @transform_8, window_bounds = array<i64: 1, 1>}, {transform_indices = @transform_9, window_bounds = array<i64: 1, 128>}]} {
    %c0 = arith.constant 0 : index
    %c0_0 = arith.constant 0 : index
    %0 = vector.load %arg1[%c0, %c0_0] : memref<16x128xf32, #tpu.memory_space<vmem>>, vector<16x128xf32>
    %1 = arith.truncf %0 : vector<16x128xf32> to vector<16x128xbf16>
    %c0_1 = arith.constant 0 : index
    %c0_2 = arith.constant 0 : index
    %2 = vector.load %arg2[%c0_1, %c0_2] : memref<32x16xbf16, #tpu.memory_space<vmem>>, vector<32x16xbf16>
    %cst = arith.constant dense<0.000000e+00> : vector<32x128xf32>
    %3 = tpu.matmul %2, %1, %cst {dimension_numbers = #tpu.dot_dimension_numbers<[1], [0], [0], [1], [0, 0, 1, 1], [], []>} : vector<32x16xbf16>, vector<16x128xbf16>, vector<32x128xf32> -> vector<32x128xf32>
    %c0_3 = arith.constant 0 : index
    %c0_4 = arith.constant 0 : index
    %4 = vector.load %arg3[%c0_3, %c0_4] : memref<32x1xf32, #tpu.memory_space<vmem>>, vector<32x1xf32>
    %5 = vector.broadcast %4 : vector<32x1xf32> to vector<32x128xf32>
    %6 = arith.addf %3, %5 : vector<32x128xf32>
    %cst_5 = arith.constant 0.000000e+00 : f32
    %7 = vector.broadcast %cst_5 : f32 to vector<32x128xf32>
    %8 = arith.cmpf ogt, %6, %7 : vector<32x128xf32>
    %cst_6 = arith.constant 2.000000e-01 : f32
    %9 = vector.broadcast %cst_6 : f32 to vector<32x128xf32>
    %10 = arith.mulf %9, %6 : vector<32x128xf32>
    %11 = arith.select %8, %6, %10 : vector<32x128xi1>, vector<32x128xf32>
    %c0_7 = arith.constant 0 : index
    %c0_8 = arith.constant 0 : index
    %12 = vector.load %arg4[%c0_7, %c0_8] : memref<32x32xbf16, #tpu.memory_space<vmem>>, vector<32x32xbf16>
    %13 = arith.truncf %11 : vector<32x128xf32> to vector<32x128xbf16>
    %cst_9 = arith.constant dense<0.000000e+00> : vector<32x128xf32>
    %14 = tpu.matmul %12, %13, %cst_9 {dimension_numbers = #tpu.dot_dimension_numbers<[1], [0], [0], [1], [0, 0, 1, 1], [], []>} : vector<32x32xbf16>, vector<32x128xbf16>, vector<32x128xf32> -> vector<32x128xf32>
    %c0_10 = arith.constant 0 : index
    %c0_11 = arith.constant 0 : index
    %15 = vector.load %arg5[%c0_10, %c0_11] : memref<32x1xf32, #tpu.memory_space<vmem>>, vector<32x1xf32>
    %16 = vector.broadcast %15 : vector<32x1xf32> to vector<32x128xf32>
    %17 = arith.addf %14, %16 : vector<32x128xf32>
    %cst_12 = arith.constant 0.000000e+00 : f32
    %18 = vector.broadcast %cst_12 : f32 to vector<32x128xf32>
    %19 = arith.cmpf ogt, %17, %18 : vector<32x128xf32>
    %cst_13 = arith.constant 2.000000e-01 : f32
    %20 = vector.broadcast %cst_13 : f32 to vector<32x128xf32>
    %21 = arith.mulf %20, %17 : vector<32x128xf32>
    %22 = arith.select %19, %17, %21 : vector<32x128xi1>, vector<32x128xf32>
    %c0_14 = arith.constant 0 : index
    %c0_15 = arith.constant 0 : index
    %23 = vector.load %arg6[%c0_14, %c0_15] : memref<32x32xbf16, #tpu.memory_space<vmem>>, vector<32x32xbf16>
    %24 = arith.truncf %22 : vector<32x128xf32> to vector<32x128xbf16>
    %cst_16 = arith.constant dense<0.000000e+00> : vector<32x128xf32>
    %25 = tpu.matmul %23, %24, %cst_16 {dimension_numbers = #tpu.dot_dimension_numbers<[1], [0], [0], [1], [0, 0, 1, 1], [], []>} : vector<32x32xbf16>, vector<32x128xbf16>, vector<32x128xf32> -> vector<32x128xf32>
    %c0_17 = arith.constant 0 : index
    %c0_18 = arith.constant 0 : index
    %26 = vector.load %arg7[%c0_17, %c0_18] : memref<32x1xf32, #tpu.memory_space<vmem>>, vector<32x1xf32>
    %27 = vector.broadcast %26 : vector<32x1xf32> to vector<32x128xf32>
    %28 = arith.addf %25, %27 : vector<32x128xf32>
    %cst_19 = arith.constant 0.000000e+00 : f32
    %29 = vector.broadcast %cst_19 : f32 to vector<32x128xf32>
    %30 = arith.cmpf ogt, %28, %29 : vector<32x128xf32>
    %cst_20 = arith.constant 2.000000e-01 : f32
    %31 = vector.broadcast %cst_20 : f32 to vector<32x128xf32>
    %32 = arith.mulf %31, %28 : vector<32x128xf32>
    %33 = arith.select %30, %28, %32 : vector<32x128xi1>, vector<32x128xf32>
    %c0_21 = arith.constant 0 : index
    %c0_22 = arith.constant 0 : index
    %34 = vector.load %arg8[%c0_21, %c0_22] : memref<1x32xbf16, #tpu.memory_space<vmem>>, vector<1x32xbf16>
    %35 = arith.truncf %33 : vector<32x128xf32> to vector<32x128xbf16>
    %cst_23 = arith.constant dense<0.000000e+00> : vector<1x128xf32>
    %36 = tpu.matmul %34, %35, %cst_23 {dimension_numbers = #tpu.dot_dimension_numbers<[1], [0], [0], [1], [0, 0, 1, 1], [], []>} : vector<1x32xbf16>, vector<32x128xbf16>, vector<1x128xf32> -> vector<1x128xf32>
    %c0_24 = arith.constant 0 : index
    %c0_25 = arith.constant 0 : index
    %37 = vector.load %arg9[%c0_24, %c0_25] : memref<1x1xf32, #tpu.memory_space<vmem>>, vector<1x1xf32>
    %38 = vector.broadcast %37 : vector<1x1xf32> to vector<1x128xf32>
    %39 = arith.addf %36, %38 : vector<1x128xf32>
    %c0_26 = arith.constant 0 : index
    %c0_27 = arith.constant 0 : index
    %40 = vector.load %arg10[%c0_26, %c0_27] : memref<1x128xf32, #tpu.memory_space<vmem>>, vector<1x128xf32>
    tpu.vector_store %arg10[%c0_26, %c0_27], %39 {strides = array<i32>} : memref<1x128xf32, #tpu.memory_space<vmem>>, vector<1x128xf32>,
    return
  }
  func.func @transform_0(%arg0: i32) -> (i32, i32) {
    %c0_i32 = arith.constant 0 : i32
    %c0_i32_0 = arith.constant 0 : i32
    return %c0_i32, %arg0 : i32, i32
  }
  func.func @transform_1(%arg0: i32) -> (i32, i32) {
    %c0_i32 = arith.constant 0 : i32
    %c0_i32_0 = arith.constant 0 : i32
    %c0_i32_1 = arith.constant 0 : i32
    return %c0_i32, %c0_i32_0 : i32, i32
  }
  func.func @transform_2(%arg0: i32) -> (i32, i32) {
    %c0_i32 = arith.constant 0 : i32
    %c0_i32_0 = arith.constant 0 : i32
    %c0_i32_1 = arith.constant 0 : i32
    return %c0_i32, %c0_i32_0 : i32, i32
  }
  func.func @transform_3(%arg0: i32) -> (i32, i32) {
    %c0_i32 = arith.constant 0 : i32
    %c0_i32_0 = arith.constant 0 : i32
    %c0_i32_1 = arith.constant 0 : i32
    return %c0_i32, %c0_i32_0 : i32, i32
  }
  func.func @transform_4(%arg0: i32) -> (i32, i32) {
    %c0_i32 = arith.constant 0 : i32
    %c0_i32_0 = arith.constant 0 : i32
    %c0_i32_1 = arith.constant 0 : i32
    return %c0_i32, %c0_i32_0 : i32, i32
  }
  func.func @transform_5(%arg0: i32) -> (i32, i32) {
    %c0_i32 = arith.constant 0 : i32
    %c0_i32_0 = arith.constant 0 : i32
    %c0_i32_1 = arith.constant 0 : i32
    return %c0_i32, %c0_i32_0 : i32, i32
  }
  func.func @transform_6(%arg0: i32) -> (i32, i32) {
    %c0_i32 = arith.constant 0 : i32
    %c0_i32_0 = arith.constant 0 : i32
    %c0_i32_1 = arith.constant 0 : i32
    return %c0_i32, %c0_i32_0 : i32, i32
  }
  func.func @transform_7(%arg0: i32) -> (i32, i32) {
    %c0_i32 = arith.constant 0 : i32
    %c0_i32_0 = arith.constant 0 : i32
    %c0_i32_1 = arith.constant 0 : i32
    return %c0_i32, %c0_i32_0 : i32, i32
  }
  func.func @transform_8(%arg0: i32) -> (i32, i32) {
    %c0_i32 = arith.constant 0 : i32
    %c0_i32_0 = arith.constant 0 : i32
    %c0_i32_1 = arith.constant 0 : i32
    return %c0_i32, %c0_i32_0 : i32, i32
  }
  func.func @transform_9(%arg0: i32) -> (i32, i32) {
    %c0_i32 = arith.constant 0 : i32
    %c0_i32_0 = arith.constant 0 : i32
    return %c0_i32, %arg0 : i32, i32
  }
}

</mosaic_0001>

<llo_original>
// kernel: tpu_custom_call.1
$region0: #{tpu_custom_call.1}
  #allocation0 [shape = 'u32[]', space=smem, size = 0x4, offset = 0x4, fixed_abs, tag = 'smem constant byte address 0x4 - core index']
  #allocation1 [shape = 'u32[144,128]{1,0:T(1,128)}', space=vmem, size = 0x12000, scoped, tag = 'internal scratch']
  #allocation2 [shape = 'f32[1,1]{1,0:T(1,128)S(1)}', space=vmem, size = 0x200, scoped, tag = 'scoped memory for tpu_custom_call.1']
  %s0 = inlined_call_operand.vmem [shape: f32[16,256], index: 0, kind: input, shape index: {}]
  %s1 = inlined_call_operand.vmem [shape: bf16[32,16], index: 1, kind: input, shape index: {}]
  %s2 = inlined_call_operand.vmem [shape: f32[32,1], index: 2, kind: input, shape index: {}]
  %s3 = inlined_call_operand.vmem [shape: bf16[32,32], index: 3, kind: input, shape index: {}]
  %s4 = inlined_call_operand.vmem [shape: f32[32,1], index: 4, kind: input, shape index: {}]
  %s5 = inlined_call_operand.vmem [shape: bf16[32,32], index: 5, kind: input, shape index: {}]
  %s6 = inlined_call_operand.vmem [shape: f32[32,1], index: 6, kind: input, shape index: {}]
  %s7 = inlined_call_operand.vmem [shape: bf16[1,32], index: 7, kind: input, shape index: {}]
  %s8 = inlined_call_operand.<no memory space> [shape: f32[1,1], index: 8, kind: input, shape index: {}]
  %s9 = inlined_call_operand.hbm [shape: f32[1,256], index: 9, kind: output, shape index: {}]
  %s10 = sld [smem:[#allocation0]]
  $region107: #{tpu_custom_call.1} parent=0
    _
  %s12 = ssub.s32 1, %s10
  %s13 = scalar_select 0, %s12, %s10
  %v14 = vstv %s8
  %15 = vst [vmem:[#allocation2] sm:$0x1] %v14
  $region1: #{tpu_custom_call.1} parent=0
    #allocation3 [shape = 'u8[16384]{0}', space=vmem, size = 0x4000, scoped, tag = 'input window, operand 0']
    #allocation4 [shape = 'u8[1024]{0}', space=vmem, size = 0x400, scoped, tag = 'output window, operand 0']
    #allocation5 [shape = 's32[2]{0}', space=sflag, size = 0x8, scoped, tag = 'scoped memory for tpu_custom_call.1']
    %16 = vsyncpa [#allocation5], 0
    %s17 = scalar_lea.sflag [#allocation5], 1
    %18 = vsyncpa %s17, 0
    loop: start=0, step=1, limit=4
    $region2: #{tpu_custom_call.1} parent=1 // loop_pre_header
      _
    $region3: #{tpu_custom_call.1} parent=1 // loop_header
      %s20 = sphi 0, %s24
      %p21 = scmp.ge.s32.totalorder %s20, 4
      %s30 = sphi 0, %s32
      %s33 = sphi 0, %s30
      %s34 = sphi 0, %s33
      %s50 = sphi 0, %s34
      %s54 = sphi 0, %s54
      %s56 = sphi 0, %s54
      %s57 = sphi 0, %s56
      %s71 = sphi 0, %s57
      %s75 = sphi 0, %s75
      %s77 = sphi 0, %s75
      %s78 = sphi 0, %s77
      %s92 = sphi 0, %s78
      %s96 = sphi 0, %s96
      %s98 = sphi 0, %s96
      %s99 = sphi 0, %s98
      %s113 = sphi 0, %s99
      %s117 = sphi 0, %s117
      %s119 = sphi 0, %s117
      %s120 = sphi 0, %s119
      %s134 = sphi 0, %s120
      %s138 = sphi 0, %s138
      %s140 = sphi 0, %s138
      %s141 = sphi 0, %s140
      %s155 = sphi 0, %s141
      %s159 = sphi 0, %s159
      %s161 = sphi 0, %s159
      %s162 = sphi 0, %s161
      %s176 = sphi 0, %s162
      %s180 = sphi 0, %s180
      %s182 = sphi 0, %s180
      %s183 = sphi 0, %s182
      %s197 = sphi 0, %s183
      %s201 = sphi 0, %s201
      %s203 = sphi 0, %s201
      %s204 = sphi 0, %s203
      %s218 = sphi 0, %s204
      %s224 = sphi 0, %s226
      %s227 = sphi 0, %s224
      %s228 = sphi 0, %s227
      %s244 = sphi 0, %s228
    $region4: #{tpu_custom_call.1} parent=1 // loop_header_branch
      %23 = sbr.rel (%p21) target = $region8
    $region5: #{tpu_custom_call.1} parent=1 // loop_body
      %s25 = ssub.s32 %s20, 1
      %s26 = ssub.s32 %s20, 2
      %s27 = sadd.s32 %s20, 1
      %s28 = ssub.s32 %s20, %s27
      %p29 = scmp.eq.s32.totalorder %s28, 0
      %s31 = sadd.s32 %s30, 1
      %s32 = scalar_select %p29, %s30, %s31
      %p35 = pneg %p29
      %p36 = scmp.eq.s32.totalorder %s20, 1
      %p37 = por %p35, %p36
      %p38 = scmp.ne.s32.totalorder %s30, %s33
      %p39 = scmp.eq.s32.totalorder %s20, 0
      %p40 = por %p38, %p39
      %p41 = scmp.ne.s32.totalorder %s30, %s33
      %p42 = scmp.eq.s32.totalorder %s25, 1
      %p43 = por %p41, %p42
      %p44 = scmp.ne.s32.totalorder %s33, %s34
      %p45 = scmp.eq.s32.totalorder %s25, 0
      %p46 = por %p44, %p45
      %p47 = scmp.ne.s32.totalorder %s33, %s34
      %p48 = scmp.eq.s32.totalorder %s26, 1
      %p49 = por %p47, %p48
      %p51 = scmp.ne.s32.totalorder %s34, %s50
      %p52 = scmp.eq.s32.totalorder %s26, 0
      %p53 = por %p51, %p52
      %s55 = sadd.s32 %s54, 1
      %p58 = scmp.eq.s32.totalorder %s20, 1
      %p59 = scmp.ne.s32.totalorder %s54, %s56
      %p60 = scmp.eq.s32.totalorder %s20, 0
      %p61 = por %p59, %p60
      %p62 = scmp.ne.s32.totalorder %s54, %s56
      %p63 = scmp.eq.s32.totalorder %s25, 1
      %p64 = por %p62, %p63
      %p65 = scmp.ne.s32.totalorder %s56, %s57
      %p66 = scmp.eq.s32.totalorder %s25, 0
      %p67 = por %p65, %p66
      %p68 = scmp.ne.s32.totalorder %s56, %s57
      %p69 = scmp.eq.s32.totalorder %s26, 1
      %p70 = por %p68, %p69
      %p72 = scmp.ne.s32.totalorder %s57, %s71
      %p73 = scmp.eq.s32.totalorder %s26, 0
      %p74 = por %p72, %p73
      %s76 = sadd.s32 %s75, 1
      %p79 = scmp.eq.s32.totalorder %s20, 1
      %p80 = scmp.ne.s32.totalorder %s75, %s77
      %p81 = scmp.eq.s32.totalorder %s20, 0
      %p82 = por %p80, %p81
      %p83 = scmp.ne.s32.totalorder %s75, %s77
      %p84 = scmp.eq.s32.totalorder %s25, 1
      %p85 = por %p83, %p84
      %p86 = scmp.ne.s32.totalorder %s77, %s78
      %p87 = scmp.eq.s32.totalorder %s25, 0
      %p88 = por %p86, %p87
      %p89 = scmp.ne.s32.totalorder %s77, %s78
      %p90 = scmp.eq.s32.totalorder %s26, 1
      %p91 = por %p89, %p90
      %p93 = scmp.ne.s32.totalorder %s78, %s92
      %p94 = scmp.eq.s32.totalorder %s26, 0
      %p95 = por %p93, %p94
      %s97 = sadd.s32 %s96, 1
      %p100 = scmp.eq.s32.totalorder %s20, 1
      %p101 = scmp.ne.s32.totalorder %s96, %s98
      %p102 = scmp.eq.s32.totalorder %s20, 0
      %p103 = por %p101, %p102
      %p104 = scmp.ne.s32.totalorder %s96, %s98
      %p105 = scmp.eq.s32.totalorder %s25, 1
      %p106 = por %p104, %p105
      %p107 = scmp.ne.s32.totalorder %s98, %s99
      %p108 = scmp.eq.s32.totalorder %s25, 0
      %p109 = por %p107, %p108
      %p110 = scmp.ne.s32.totalorder %s98, %s99
      %p111 = scmp.eq.s32.totalorder %s26, 1
      %p112 = por %p110, %p111
      %p114 = scmp.ne.s32.totalorder %s99, %s113
      %p115 = scmp.eq.s32.totalorder %s26, 0
      %p116 = por %p114, %p115
      %s118 = sadd.s32 %s117, 1
      %p121 = scmp.eq.s32.totalorder %s20, 1
      %p122 = scmp.ne.s32.totalorder %s117, %s119
      %p123 = scmp.eq.s32.totalorder %s20, 0
      %p124 = por %p122, %p123
      %p125 = scmp.ne.s32.totalorder %s117, %s119
      %p126 = scmp.eq.s32.totalorder %s25, 1
      %p127 = por %p125, %p126
      %p128 = scmp.ne.s32.totalorder %s119, %s120
      %p129 = scmp.eq.s32.totalorder %s25, 0
      %p130 = por %p128, %p129
      %p131 = scmp.ne.s32.totalorder %s119, %s120
      %p132 = scmp.eq.s32.totalorder %s26, 1
      %p133 = por %p131, %p132
      %p135 = scmp.ne.s32.totalorder %s120, %s134
      %p136 = scmp.eq.s32.totalorder %s26, 0
      %p137 = por %p135, %p136
      %s139 = sadd.s32 %s138, 1
      %p142 = scmp.eq.s32.totalorder %s20, 1
      %p143 = scmp.ne.s32.totalorder %s138, %s140
      %p144 = scmp.eq.s32.totalorder %s20, 0
      %p145 = por %p143, %p144
      %p146 = scmp.ne.s32.totalorder %s138, %s140
      %p147 = scmp.eq.s32.totalorder %s25, 1
      %p148 = por %p146, %p147
      %p149 = scmp.ne.s32.totalorder %s140, %s141
      %p150 = scmp.eq.s32.totalorder %s25, 0
      %p151 = por %p149, %p150
      %p152 = scmp.ne.s32.totalorder %s140, %s141
      %p153 = scmp.eq.s32.totalorder %s26, 1
      %p154 = por %p152, %p153
      %p156 = scmp.ne.s32.totalorder %s141, %s155
      %p157 = scmp.eq.s32.totalorder %s26, 0
      %p158 = por %p156, %p157
      %s160 = sadd.s32 %s159, 1
      %p163 = scmp.eq.s32.totalorder %s20, 1
      %p164 = scmp.ne.s32.totalorder %s159, %s161
      %p165 = scmp.eq.s32.totalorder %s20, 0
      %p166 = por %p164, %p165
      %p167 = scmp.ne.s32.totalorder %s159, %s161
      %p168 = scmp.eq.s32.totalorder %s25, 1
      %p169 = por %p167, %p168
      %p170 = scmp.ne.s32.totalorder %s161, %s162
      %p171 = scmp.eq.s32.totalorder %s25, 0
      %p172 = por %p170, %p171
      %p173 = scmp.ne.s32.totalorder %s161, %s162
      %p174 = scmp.eq.s32.totalorder %s26, 1
      %p175 = por %p173, %p174
      %p177 = scmp.ne.s32.totalorder %s162, %s176
      %p178 = scmp.eq.s32.totalorder %s26, 0
      %p179 = por %p177, %p178
      %s181 = sadd.s32 %s180, 1
      %p184 = scmp.eq.s32.totalorder %s20, 1
      %p185 = scmp.ne.s32.totalorder %s180, %s182
      %p186 = scmp.eq.s32.totalorder %s20, 0
      %p187 = por %p185, %p186
      %p188 = scmp.ne.s32.totalorder %s180, %s182
      %p189 = scmp.eq.s32.totalorder %s25, 1
      %p190 = por %p188, %p189
      %p191 = scmp.ne.s32.totalorder %s182, %s183
      %p192 = scmp.eq.s32.totalorder %s25, 0
      %p193 = por %p191, %p192
      %p194 = scmp.ne.s32.totalorder %s182, %s183
      %p195 = scmp.eq.s32.totalorder %s26, 1
      %p196 = por %p194, %p195
      %p198 = scmp.ne.s32.totalorder %s183, %s197
      %p199 = scmp.eq.s32.totalorder %s26, 0
      %p200 = por %p198, %p199
      %s202 = sadd.s32 %s201, 1
      %p205 = scmp.eq.s32.totalorder %s20, 1
      %p206 = scmp.ne.s32.totalorder %s201, %s203
      %p207 = scmp.eq.s32.totalorder %s20, 0
      %p208 = por %p206, %p207
      %p209 = scmp.ne.s32.totalorder %s201, %s203
      %p210 = scmp.eq.s32.totalorder %s25, 1
      %p211 = por %p209, %p210
      %p212 = scmp.ne.s32.totalorder %s203, %s204
      %p213 = scmp.eq.s32.totalorder %s25, 0
      %p214 = por %p212, %p213
      %p215 = scmp.ne.s32.totalorder %s203, %s204
      %p216 = scmp.eq.s32.totalorder %s26, 1
      %p217 = por %p215, %p216
      %p219 = scmp.ne.s32.totalorder %s204, %s218
      %p220 = scmp.eq.s32.totalorder %s26, 0
      %p221 = por %p219, %p220
      %s222 = ssub.s32 %s20, %s27
      %p223 = scmp.eq.s32.totalorder %s222, 0
      %s225 = sadd.s32 %s224, 1
      %s226 = scalar_select %p223, %s224, %s225
      %p229 = pneg %p223
      %p230 = scmp.eq.s32.totalorder %s20, 1
      %p231 = por %p229, %p230
      %p232 = scmp.ne.s32.totalorder %s224, %s227
      %p233 = scmp.eq.s32.totalorder %s20, 0
      %p234 = por %p232, %p233
      %p235 = scmp.ne.s32.totalorder %s224, %s227
      %p236 = scmp.eq.s32.totalorder %s25, 1
      %p237 = por %p235, %p236
      %p238 = scmp.ne.s32.totalorder %s227, %s228
      %p239 = scmp.eq.s32.totalorder %s25, 0
      %p240 = por %p238, %p239
      %p241 = scmp.ne.s32.totalorder %s227, %s228
      %p242 = scmp.eq.s32.totalorder %s26, 1
      %p243 = por %p241, %p242
      %p245 = scmp.ne.s32.totalorder %s228, %s244
      %p246 = scmp.eq.s32.totalorder %s26, 0
      %p247 = por %p245, %p246
      %p248 = scmp.le.s32.totalorder 1, %s20
      %p249 = scmp.lt.s32.totalorder %s20, 3
      %p250 = pnand %p248, %p249
      %p251 = pneg %p250
      // Predicated region
      $region9: #{tpu_custom_call.1} parent=5 // pred_check
        _
      $region10: #{tpu_custom_call.1} parent=5 // pred_check_branch
        %253 = sbr.rel (%p250) target = $region12
      $region11: #{tpu_custom_call.1} parent=5 // pred_region
        %s254 = ssub.s32 %s20, 1
        // Predicated region
        $region13: #{tpu_custom_call.1} parent=11 // pred_check
          %p255 = pneg %p67
        $region14: #{tpu_custom_call.1} parent=11 // pred_check_branch
          %257 = sbr.rel (%p255) target = $region16
        $region15: #{tpu_custom_call.1} parent=11 // pred_region
          _
        $region16: #{tpu_custom_call.1} parent=11 // pred_fallthru
          _
        // Predicated region
        $region17: #{tpu_custom_call.1} parent=11 // pred_check
          %p258 = pneg %p88
        $region18: #{tpu_custom_call.1} parent=11 // pred_check_branch
          %260 = sbr.rel (%p258) target = $region20
        $region19: #{tpu_custom_call.1} parent=11 // pred_region
          _
        $region20: #{tpu_custom_call.1} parent=11 // pred_fallthru
          _
        // Predicated region
        $region21: #{tpu_custom_call.1} parent=11 // pred_check
          %p261 = pneg %p109
        $region22: #{tpu_custom_call.1} parent=11 // pred_check_branch
          %263 = sbr.rel (%p261) target = $region24
        $region23: #{tpu_custom_call.1} parent=11 // pred_region
          _
        $region24: #{tpu_custom_call.1} parent=11 // pred_fallthru
          _
        // Predicated region
        $region25: #{tpu_custom_call.1} parent=11 // pred_check
          %p264 = pneg %p130
        $region26: #{tpu_custom_call.1} parent=11 // pred_check_branch
          %266 = sbr.rel (%p264) target = $region28
        $region27: #{tpu_custom_call.1} parent=11 // pred_region
          _
        $region28: #{tpu_custom_call.1} parent=11 // pred_fallthru
          _
        // Predicated region
        $region29: #{tpu_custom_call.1} parent=11 // pred_check
          %p267 = pneg %p151
        $region30: #{tpu_custom_call.1} parent=11 // pred_check_branch
          %269 = sbr.rel (%p267) target = $region32
        $region31: #{tpu_custom_call.1} parent=11 // pred_region
          _
        $region32: #{tpu_custom_call.1} parent=11 // pred_fallthru
          _
        // Predicated region
        $region33: #{tpu_custom_call.1} parent=11 // pred_check
          %p270 = pneg %p172
        $region34: #{tpu_custom_call.1} parent=11 // pred_check_branch
          %272 = sbr.rel (%p270) target = $region36
        $region35: #{tpu_custom_call.1} parent=11 // pred_region
          _
        $region36: #{tpu_custom_call.1} parent=11 // pred_fallthru
          _
        // Predicated region
        $region37: #{tpu_custom_call.1} parent=11 // pred_check
          %p273 = pneg %p193
        $region38: #{tpu_custom_call.1} parent=11 // pred_check_branch
          %275 = sbr.rel (%p273) target = $region40
        $region39: #{tpu_custom_call.1} parent=11 // pred_region
          _
        $region40: #{tpu_custom_call.1} parent=11 // pred_fallthru
          _
        // Predicated region
        $region41: #{tpu_custom_call.1} parent=11 // pred_check
          %p276 = pneg %p214
        $region42: #{tpu_custom_call.1} parent=11 // pred_check_branch
          %278 = sbr.rel (%p276) target = $region44
        $region43: #{tpu_custom_call.1} parent=11 // pred_region
          _
        $region44: #{tpu_custom_call.1} parent=11 // pred_fallthru
          _
      $region12: #{tpu_custom_call.1} parent=5 // pred_fallthru
        _
      %p279 = scmp.lt.s32.totalorder %s20, 2
      // Predicated region
      $region45: #{tpu_custom_call.1} parent=5 // pred_check
        %p280 = pneg %p279
      $region46: #{tpu_custom_call.1} parent=5 // pred_check_branch
        %282 = sbr.rel (%p280) target = $region48
      $region47: #{tpu_custom_call.1} parent=5 // pred_region
        // Predicated region
        $region49: #{tpu_custom_call.1} parent=47 // pred_check
          %p283 = pneg %p40
        $region50: #{tpu_custom_call.1} parent=47 // pred_check_branch
          %285 = sbr.rel (%p283) target = $region52
        $region51: #{tpu_custom_call.1} parent=47 // pred_region
          %s286 = sand.u32 %s30, 1
          %s287 = sand.u32 %s30, 1
          %s288 = smul.addr %s287, 16
          %s289 = scalar_lea.vmem [#allocation3], %s288
          %s290 = smul.addr %s20, 8
          %s291 = scalar_lea.vmem %s0, %s290
          // Predicated region
          $region53: #{tpu_custom_call.1} parent=51 // pred_check
            _
          $region54: #{tpu_custom_call.1} parent=51 // pred_check_branch
            %293 = sbr.rel (0) target = $region56
          $region55: #{tpu_custom_call.1} parent=51 // pred_region
            // Predicated region
            $region57: #{tpu_custom_call.1} parent=55 // pred_check
              _
            $region58: #{tpu_custom_call.1} parent=55 // pred_check_branch
              %295 = sbr.rel (0) target = $region60
            $region59: #{tpu_custom_call.1} parent=55 // pred_region
              // Predicated region
              $region72: #{tpu_custom_call.1} parent=59 // pred_check
                _
              $region73: #{tpu_custom_call.1} parent=59 // pred_check_branch
                %312 = sbr.rel (0) target = $region75
              $region74: #{tpu_custom_call.1} parent=59 // pred_region
                loop: start=0, step=1, limit=1
                $region76: #{tpu_custom_call.1} parent=74 // loop_pre_header
                  _
                $region77: #{tpu_custom_call.1} parent=74 // loop_header
                  %s314 = sphi 0, %s318
                  %p315 = scmp.ge.s32.totalorder %s314, 1
                  %s319 = sphi %s291, %s291
                  %s320 = sphi %s289, %s289
                $region78: #{tpu_custom_call.1} parent=74 // loop_header_branch
                  %317 = sbr.rel (%p315) target = $region82
                $region79: #{tpu_custom_call.1} parent=74 // loop_body
                  %v321 = vld [vmem:[%s319] sm:$0xff]
                  %322 = vst [vmem:[%s320] sm:$0xff] %v321
                  %v323 = vld [vmem:[%s319 + $0x10] sm:$0xff]
                  %324 = vst [vmem:[%s320 + $0x8] sm:$0xff] %v323
                $region80: #{tpu_custom_call.1} parent=74 // loop_footer
                  %s318 = sadd.s32 1, %s314
                $region81: #{tpu_custom_call.1} parent=74 // loop_footer_branch
                  %313 = sbr.rel target = $region77
                $region82: #{tpu_custom_call.1} parent=74 // loop_exit
                  _
              $region75: #{tpu_custom_call.1} parent=59 // pred_fallthru
                _
              // Predicated region
              $region83: #{tpu_custom_call.1} parent=59 // pred_check
                _
              $region84: #{tpu_custom_call.1} parent=59 // pred_check_branch
                %326 = sbr.rel target = $region86
              $region85: #{tpu_custom_call.1} parent=59 // pred_region
                _
              $region86: #{tpu_custom_call.1} parent=59 // pred_fallthru
                _
            $region60: #{tpu_custom_call.1} parent=55 // pred_fallthru
              _
            // Predicated region
            $region61: #{tpu_custom_call.1} parent=55 // pred_check
              _
            $region62: #{tpu_custom_call.1} parent=55 // pred_check_branch
              %297 = sbr.rel target = $region64
            $region63: #{tpu_custom_call.1} parent=55 // pred_region
              loop: start=0, step=1, limit=1
              $region65: #{tpu_custom_call.1} parent=63 // loop_pre_header
                _
              $region66: #{tpu_custom_call.1} parent=63 // loop_header
                %s300 = sphi 0, %s304
                %p301 = scmp.ge.s32.totalorder %s300, 1
                %s305 = sphi %s291, %s291
                %s306 = sphi %s289, %s289
              $region67: #{tpu_custom_call.1} parent=63 // loop_header_branch
                %303 = sbr.rel (%p301) target = $region71
              $region68: #{tpu_custom_call.1} parent=63 // loop_body
                %v307 = vld [vmem:[%s305] sm:$0xff]
                %308 = vst [vmem:[%s306] sm:$0xff] %v307
                %v309 = vld [vmem:[%s305 + $0x10] sm:$0xff]
                %310 = vst [vmem:[%s306 + $0x8] sm:$0xff] %v309
              $region69: #{tpu_custom_call.1} parent=63 // loop_footer
                %s304 = sadd.s32 1, %s300
              $region70: #{tpu_custom_call.1} parent=63 // loop_footer_branch
                %299 = sbr.rel target = $region66
              $region71: #{tpu_custom_call.1} parent=63 // loop_exit
                _
            $region64: #{tpu_custom_call.1} parent=55 // pred_fallthru
              _
          $region56: #{tpu_custom_call.1} parent=51 // pred_fallthru
            _
          %327 = vnop
        $region52: #{tpu_custom_call.1} parent=47 // pred_fallthru
          _
      $region48: #{tpu_custom_call.1} parent=5 // pred_fallthru
        _
      %p328 = scmp.le.s32.totalorder 1, %s20
      %p329 = scmp.lt.s32.totalorder %s20, 3
      %p330 = pnand %p328, %p329
      %p331 = pneg %p330
      // Predicated region
      $region87: #{tpu_custom_call.1} parent=5 // pred_check
        _
      $region88: #{tpu_custom_call.1} parent=5 // pred_check_branch
        %333 = sbr.rel (%p330) target = $region90
      $region89: #{tpu_custom_call.1} parent=5 // pred_region
        %s334 = ssub.s32 %s20, 1
        %s335 = sand.u32 %s33, 1
        %s336 = sand.u32 %s33, 1
        %s337 = smul.addr %s336, 16
        %s338 = scalar_lea.vmem [#allocation3], %s337
        // Predicated region
        $region91: #{tpu_custom_call.1} parent=89 // pred_check
          %p339 = pneg %p46
        $region92: #{tpu_custom_call.1} parent=89 // pred_check_branch
          %341 = sbr.rel (%p339) target = $region94
        $region93: #{tpu_custom_call.1} parent=89 // pred_region
          _
        $region94: #{tpu_custom_call.1} parent=89 // pred_fallthru
          _
        %s342 = sand.u32 %s33, 1
        %s343 = sand.u32 %s33, 1
        %s344 = smul.addr %s343, 16
        %s345 = scalar_lea.vmem [#allocation3], %s344
        %p346 = pneg %p46
        %p347 = pneg %p43
        %p348 = pneg %p67
        %p349 = pneg %p64
        %p350 = pneg %p88
        %p351 = pneg %p85
        %p352 = pneg %p109
        %p353 = pneg %p106
        %p354 = pneg %p130
        %p355 = pneg %p127
        %p356 = pneg %p151
        %p357 = pneg %p148
        %p358 = pneg %p172
        %p359 = pneg %p169
        %p360 = pneg %p193
        %p361 = pneg %p190
        %p362 = pneg %p214
        %p363 = pneg %p211
        %p364 = pneg %p240
        %p365 = pneg %p237
        %s366 = sand.u32 %s227, 1
        %s367 = scalar_lea.sflag [#allocation5], %s366
        %s368 = sand.u32 %s227, 1
        %s369 = scalar_lea.vmem [#allocation4], %s368
        %v371 = vld [vmem:[%s338] sm:$0xff]
        %v372 = vld [vmem:[%s338 + $0x8] sm:$0xff]
        %v373 = vpack.c.bf16 %v372, %v371
        %v374 = vld [vmem:[%s1] sm:$0xf]
        %v375 = vld [vmem:[%s1 + $0x4] sm:$0xf]
        %v376 = vld [vmem:[%s1 + $0x8] sm:$0xf]
        %v377 = vld [vmem:[%s1 + $0xc] sm:$0xf]
        %v378 = vld [vmem:[%s2] sm:$0xff]
        %v379 = vld [vmem:[%s2 + $0x8] sm:$0xff]
        %v380 = vld [vmem:[%s2 + $0x10] sm:$0xff]
        %v381 = vld [vmem:[%s2 + $0x18] sm:$0xff]
        %383 = vset.pattern.permute.xlu0 0
        %384 = vperm.xlu0 %383, %v378
        %v385 = vpop.permute.xlu0 %384
        %388 = vset.pattern.permute.xlu0 0
        %389 = vperm.xlu0 %388, %v379
        %v390 = vpop.permute.xlu0 %389
        %393 = vset.pattern.permute.xlu0 0
        %394 = vperm.xlu0 %393, %v380
        %v395 = vpop.permute.xlu0 %394
        %398 = vset.pattern.permute.xlu0 0
        %399 = vperm.xlu0 %398, %v381
        %v400 = vpop.permute.xlu0 %399
        %v406 = vunpack.c.l.b16 %v374
        %v407 = vunpack.c.l.b16 %v375
        %v408 = vunpack.c.l.b16 %v376
        %v409 = vunpack.c.l.b16 %v377
        %v410 = vpack.c.b16 %v407, %v406
        %v411 = vpack.c.b16 %v409, %v408
        %vm412 = vcmask 130048
        %v414 = vsel %vm412, %v410, 0
        %v417 = vsel %vm412, %v411, 0
        %419 = vmatprep.subr.bf16.mxu0 0
        %420 = vmatpush1.bf16.msra.mxu0 %v373
        %421 = vmatprep.subr.bf16.mxu0 0
        %422 = vmatpush1.bf16.msra.mxu0 0
        %423 = vmatprep.subr.bf16.mxu0 0
        %424 = vmatpush1.bf16.msra.mxu0 0
        %425 = vmatprep.subr.bf16.mxu0 0
        %426 = vmatpush1.bf16.msra.mxu0 0
        %427 = vmatprep.subr.bf16.mxu0 0
        %428 = vmatpush1.bf16.msra.mxu0 0
        %429 = vmatprep.subr.bf16.mxu0 0
        %430 = vmatpush1.bf16.msra.mxu0 0
        %431 = vmatprep.subr.bf16.mxu0 0
        %432 = vmatpush1.bf16.msra.mxu0 0
        %433 = vmatprep.subr.bf16.mxu0 0
        %434 = vmatpush1.bf16.msra.mxu0 0
        %435 = vmatprep.subr.bf16.mxu0 0
        %436 = vmatpush1.bf16.msra.mxu0 0
        %437 = vmatprep.subr.bf16.mxu0 0
        %438 = vmatpush1.bf16.msra.mxu0 0
        %439 = vmatprep.subr.bf16.mxu0 0
        %440 = vmatpush1.bf16.msra.mxu0 0
        %441 = vmatprep.subr.bf16.mxu0 0
        %442 = vmatpush1.bf16.msra.mxu0 0
        %443 = vmatprep.subr.bf16.mxu0 0
        %444 = vmatpush1.bf16.msra.mxu0 0
        %445 = vmatprep.subr.bf16.mxu0 0
        %446 = vmatpush1.bf16.msra.mxu0 0
        %447 = vmatprep.subr.bf16.mxu0 0
        %448 = vmatpush1.bf16.msra.mxu0 0
        %449 = vmatprep.subr.bf16.mxu0 0
        %450 = vmatpush1.bf16.msra.mxu0 0
        %451 = vmatprep.mubr.bf16.mxu0 0
        %452 = vmatmul.mubr.bf16.gmra.mrb[0].mxu0 %v414
        %v453 = vpop.f32.mrb[0].mxu0
        %v454 = vadd.f32 %v385, %v453
        %v455 = vpop.f32.mrb[0].mxu0
        %v456 = vpop.f32.mrb[0].mxu0
        %v457 = vadd.f32 %v390, %v456
        %v458 = vpop.f32.mrb[0].mxu0
        %459 = vmatprep.mubr.bf16.mxu0 0
        %460 = vmatmul.mubr.bf16.gmra.mrb[0].mxu0 %v417
        %v461 = vpop.f32.mrb[0].mxu0
        %v462 = vadd.f32 %v395, %v461
        %v463 = vpop.f32.mrb[0].mxu0
        %v464 = vpop.f32.mrb[0].mxu0
        %v465 = vadd.f32 %v400, %v464
        %v466 = vpop.f32.mrb[0].mxu0
        %467 = vdwg.mxu0
        %vm468 = vcmp.gt.f32.partialorder %v454, 0.0
        %vm469 = vcmp.gt.f32.partialorder %v457, 0.0
        %vm470 = vcmp.gt.f32.partialorder %v462, 0.0
        %vm471 = vcmp.gt.f32.partialorder %v465, 0.0
        %v472 = vmul.f32 %v454, 0.2
        %v473 = vmul.f32 %v457, 0.2
        %v474 = vmul.f32 %v462, 0.2
        %v475 = vmul.f32 %v465, 0.2
        %v476 = vsel %vm468, %v454, %v472
        %v477 = vsel %vm469, %v457, %v473
        %v478 = vsel %vm470, %v462, %v474
        %v479 = vsel %vm471, %v465, %v475
        %v480 = vld [vmem:[%s3] sm:$0xf]
        %v481 = vld [vmem:[%s3 + $0x4] sm:$0xf]
        %v482 = vld [vmem:[%s3 + $0x8] sm:$0xf]
        %v483 = vld [vmem:[%s3 + $0xc] sm:$0xf]
        %v484 = vpack.c.bf16 %v477, %v476
        %v485 = vpack.c.bf16 %v479, %v478
        %v486 = vld [vmem:[%s4] sm:$0xff]
        %v487 = vld [vmem:[%s4 + $0x8] sm:$0xff]
        %v488 = vld [vmem:[%s4 + $0x10] sm:$0xff]
        %v489 = vld [vmem:[%s4 + $0x18] sm:$0xff]
        %491 = vset.pattern.permute.xlu0 0
        %492 = vperm.xlu0 %491, %v486
        %v493 = vpop.permute.xlu0 %492
        %496 = vset.pattern.permute.xlu0 0
        %497 = vperm.xlu0 %496, %v487
        %v498 = vpop.permute.xlu0 %497
        %501 = vset.pattern.permute.xlu0 0
        %502 = vperm.xlu0 %501, %v488
        %v503 = vpop.permute.xlu0 %502
        %506 = vset.pattern.permute.xlu0 0
        %507 = vperm.xlu0 %506, %v489
        %v508 = vpop.permute.xlu0 %507
        %v514 = vunpack.c.l.b16 %v480
        %v515 = vunpack.c.l.b16 %v481
        %v516 = vunpack.c.l.b16 %v482
        %v517 = vunpack.c.l.b16 %v483
        %v518 = vpack.c.b16 %v515, %v514
        %v519 = vpack.c.b16 %v517, %v516
        %vm520 = vcmask 261120
        %v522 = vsel %vm520, %v518, 0
        %v525 = vsel %vm520, %v519, 0
        %527 = vmatprep.subr.bf16.mxu0 0
        %528 = vmatpush1.bf16.msra.mxu0 %v484
        %529 = vmatprep.subr.bf16.mxu0 0
        %530 = vmatpush1.bf16.msra.mxu0 %v485
        %531 = vmatprep.subr.bf16.mxu0 0
        %532 = vmatpush1.bf16.msra.mxu0 0
        %533 = vmatprep.subr.bf16.mxu0 0
        %534 = vmatpush1.bf16.msra.mxu0 0
        %535 = vmatprep.subr.bf16.mxu0 0
        %536 = vmatpush1.bf16.msra.mxu0 0
        %537 = vmatprep.subr.bf16.mxu0 0
        %538 = vmatpush1.bf16.msra.mxu0 0
        %539 = vmatprep.subr.bf16.mxu0 0
        %540 = vmatpush1.bf16.msra.mxu0 0
        %541 = vmatprep.subr.bf16.mxu0 0
        %542 = vmatpush1.bf16.msra.mxu0 0
        %543 = vmatprep.subr.bf16.mxu0 0
        %544 = vmatpush1.bf16.msra.mxu0 0
        %545 = vmatprep.subr.bf16.mxu0 0
        %546 = vmatpush1.bf16.msra.mxu0 0
        %547 = vmatprep.subr.bf16.mxu0 0
        %548 = vmatpush1.bf16.msra.mxu0 0
        %549 = vmatprep.subr.bf16.mxu0 0
        %550 = vmatpush1.bf16.msra.mxu0 0
        %551 = vmatprep.subr.bf16.mxu0 0
        %552 = vmatpush1.bf16.msra.mxu0 0
        %553 = vmatprep.subr.bf16.mxu0 0
        %554 = vmatpush1.bf16.msra.mxu0 0
        %555 = vmatprep.subr.bf16.mxu0 0
        %556 = vmatpush1.bf16.msra.mxu0 0
        %557 = vmatprep.subr.bf16.mxu0 0
        %558 = vmatpush1.bf16.msra.mxu0 0
        %559 = vmatprep.mubr.bf16.mxu0 0
        %560 = vmatmul.mubr.bf16.gmra.mrb[0].mxu0 %v522
        %v561 = vpop.f32.mrb[0].mxu0
        %v562 = vadd.f32 %v493, %v561
        %v563 = vpop.f32.mrb[0].mxu0
        %v564 = vpop.f32.mrb[0].mxu0
        %v565 = vadd.f32 %v498, %v564
        %v566 = vpop.f32.mrb[0].mxu0
        %567 = vmatprep.mubr.bf16.mxu0 0
        %568 = vmatmul.mubr.bf16.gmra.mrb[0].mxu0 %v525
        %v569 = vpop.f32.mrb[0].mxu0
        %v570 = vadd.f32 %v503, %v569
        %v571 = vpop.f32.mrb[0].mxu0
        %v572 = vpop.f32.mrb[0].mxu0
        %v573 = vadd.f32 %v508, %v572
        %v574 = vpop.f32.mrb[0].mxu0
        %575 = vdwg.mxu0
        %vm576 = vcmp.gt.f32.partialorder %v562, 0.0
        %vm577 = vcmp.gt.f32.partialorder %v565, 0.0
        %vm578 = vcmp.gt.f32.partialorder %v570, 0.0
        %vm579 = vcmp.gt.f32.partialorder %v573, 0.0
        %v580 = vmul.f32 %v562, 0.2
        %v581 = vmul.f32 %v565, 0.2
        %v582 = vmul.f32 %v570, 0.2
        %v583 = vmul.f32 %v573, 0.2
        %v584 = vsel %vm576, %v562, %v580
        %v585 = vsel %vm577, %v565, %v581
        %v586 = vsel %vm578, %v570, %v582
        %v587 = vsel %vm579, %v573, %v583
        %v588 = vld [vmem:[%s5] sm:$0xf]
        %v589 = vld [vmem:[%s5 + $0x4] sm:$0xf]
        %v590 = vld [vmem:[%s5 + $0x8] sm:$0xf]
        %v591 = vld [vmem:[%s5 + $0xc] sm:$0xf]
        %v592 = vpack.c.bf16 %v585, %v584
        %v593 = vpack.c.bf16 %v587, %v586
        %v594 = vld [vmem:[%s6] sm:$0xff]
        %v595 = vld [vmem:[%s6 + $0x8] sm:$0xff]
        %v596 = vld [vmem:[%s6 + $0x10] sm:$0xff]
        %v597 = vld [vmem:[%s6 + $0x18] sm:$0xff]
        %599 = vset.pattern.permute.xlu0 0
        %600 = vperm.xlu0 %599, %v594
        %v601 = vpop.permute.xlu0 %600
        %604 = vset.pattern.permute.xlu0 0
        %605 = vperm.xlu0 %604, %v595
        %v606 = vpop.permute.xlu0 %605
        %609 = vset.pattern.permute.xlu0 0
        %610 = vperm.xlu0 %609, %v596
        %v611 = vpop.permute.xlu0 %610
        %614 = vset.pattern.permute.xlu0 0
        %615 = vperm.xlu0 %614, %v597
        %v616 = vpop.permute.xlu0 %615
        %v622 = vunpack.c.l.b16 %v588
        %v623 = vunpack.c.l.b16 %v589
        %v624 = vunpack.c.l.b16 %v590
        %v625 = vunpack.c.l.b16 %v591
        %v626 = vpack.c.b16 %v623, %v622
        %v627 = vpack.c.b16 %v625, %v624
        %v629 = vsel %vm520, %v626, 0
        %v632 = vsel %vm520, %v627, 0
        %634 = vmatprep.subr.bf16.mxu0 0
        %635 = vmatpush1.bf16.msra.mxu0 %v592
        %636 = vmatprep.subr.bf16.mxu0 0
        %637 = vmatpush1.bf16.msra.mxu0 %v593
        %638 = vmatprep.subr.bf16.mxu0 0
        %639 = vmatpush1.bf16.msra.mxu0 0
        %640 = vmatprep.subr.bf16.mxu0 0
        %641 = vmatpush1.bf16.msra.mxu0 0
        %642 = vmatprep.subr.bf16.mxu0 0
        %643 = vmatpush1.bf16.msra.mxu0 0
        %644 = vmatprep.subr.bf16.mxu0 0
        %645 = vmatpush1.bf16.msra.mxu0 0
        %646 = vmatprep.subr.bf16.mxu0 0
        %647 = vmatpush1.bf16.msra.mxu0 0
        %648 = vmatprep.subr.bf16.mxu0 0
        %649 = vmatpush1.bf16.msra.mxu0 0
        %650 = vmatprep.subr.bf16.mxu0 0
        %651 = vmatpush1.bf16.msra.mxu0 0
        %652 = vmatprep.subr.bf16.mxu0 0
        %653 = vmatpush1.bf16.msra.mxu0 0
        %654 = vmatprep.subr.bf16.mxu0 0
        %655 = vmatpush1.bf16.msra.mxu0 0
        %656 = vmatprep.subr.bf16.mxu0 0
        %657 = vmatpush1.bf16.msra.mxu0 0
        %658 = vmatprep.subr.bf16.mxu0 0
        %659 = vmatpush1.bf16.msra.mxu0 0
        %660 = vmatprep.subr.bf16.mxu0 0
        %661 = vmatpush1.bf16.msra.mxu0 0
        %662 = vmatprep.subr.bf16.mxu0 0
        %663 = vmatpush1.bf16.msra.mxu0 0
        %664 = vmatprep.subr.bf16.mxu0 0
        %665 = vmatpush1.bf16.msra.mxu0 0
        %666 = vmatprep.mubr.bf16.mxu0 0
        %667 = vmatmul.mubr.bf16.gmra.mrb[0].mxu0 %v629
        %v668 = vpop.f32.mrb[0].mxu0
        %v669 = vadd.f32 %v601, %v668
        %v670 = vpop.f32.mrb[0].mxu0
        %v671 = vpop.f32.mrb[0].mxu0
        %v672 = vadd.f32 %v606, %v671
        %v673 = vpop.f32.mrb[0].mxu0
        %674 = vmatprep.mubr.bf16.mxu0 0
        %675 = vmatmul.mubr.bf16.gmra.mrb[0].mxu0 %v632
        %v676 = vpop.f32.mrb[0].mxu0
        %v677 = vadd.f32 %v611, %v676
        %v678 = vpop.f32.mrb[0].mxu0
        %v679 = vpop.f32.mrb[0].mxu0
        %v680 = vadd.f32 %v616, %v679
        %v681 = vpop.f32.mrb[0].mxu0
        %682 = vdwg.mxu0
        %vm683 = vcmp.gt.f32.partialorder %v669, 0.0
        %vm684 = vcmp.gt.f32.partialorder %v672, 0.0
        %vm685 = vcmp.gt.f32.partialorder %v677, 0.0
        %vm686 = vcmp.gt.f32.partialorder %v680, 0.0
        %v687 = vmul.f32 %v669, 0.2
        %v688 = vmul.f32 %v672, 0.2
        %v689 = vmul.f32 %v677, 0.2
        %v690 = vmul.f32 %v680, 0.2
        %v691 = vsel %vm683, %v669, %v687
        %v692 = vsel %vm684, %v672, %v688
        %v693 = vsel %vm685, %v677, %v689
        %v694 = vsel %vm686, %v680, %v690
        %v695 = vld [vmem:[%s7] sm:$0x1]
        %v696 = vpack.c.bf16 %v692, %v691
        %v697 = vpack.c.bf16 %v694, %v693
        %v698 = vld [vmem:[#allocation2] sm:$0x1]
        %700 = vset.pattern.permute.xlu0 0
        %701 = vperm.xlu0 %700, %v698
        %v702 = vpop.permute.xlu0 %701
        %v704 = vlaneseq
        %v705 = vshrl.u32 %v704, 7
        %v706 = vsub.s32 0, %v705
        %v707 = vrot.slane %v702, %v706
        %v709 = vsel %vm520, %v695, 0
        %711 = vmatprep.subr.bf16.mxu0 0
        %712 = vmatpush1.bf16.msra.mxu0 %v696
        %713 = vmatprep.subr.bf16.mxu0 0
        %714 = vmatpush1.bf16.msra.mxu0 %v697
        %715 = vmatprep.subr.bf16.mxu0 0
        %716 = vmatpush1.bf16.msra.mxu0 0
        %717 = vmatprep.subr.bf16.mxu0 0
        %718 = vmatpush1.bf16.msra.mxu0 0
        %719 = vmatprep.subr.bf16.mxu0 0
        %720 = vmatpush1.bf16.msra.mxu0 0
        %721 = vmatprep.subr.bf16.mxu0 0
        %722 = vmatpush1.bf16.msra.mxu0 0
        %723 = vmatprep.subr.bf16.mxu0 0
        %724 = vmatpush1.bf16.msra.mxu0 0
        %725 = vmatprep.subr.bf16.mxu0 0
        %726 = vmatpush1.bf16.msra.mxu0 0
        %727 = vmatprep.subr.bf16.mxu0 0
        %728 = vmatpush1.bf16.msra.mxu0 0
        %729 = vmatprep.subr.bf16.mxu0 0
        %730 = vmatpush1.bf16.msra.mxu0 0
        %731 = vmatprep.subr.bf16.mxu0 0
        %732 = vmatpush1.bf16.msra.mxu0 0
        %733 = vmatprep.subr.bf16.mxu0 0
        %734 = vmatpush1.bf16.msra.mxu0 0
        %735 = vmatprep.subr.bf16.mxu0 0
        %736 = vmatpush1.bf16.msra.mxu0 0
        %737 = vmatprep.subr.bf16.mxu0 0
        %738 = vmatpush1.bf16.msra.mxu0 0
        %739 = vmatprep.subr.bf16.mxu0 0
        %740 = vmatpush1.bf16.msra.mxu0 0
        %741 = vmatprep.subr.bf16.mxu0 0
        %742 = vmatpush1.bf16.msra.mxu0 0
        %743 = vmatprep.mubr.bf16.mxu0 0
        %744 = vmatmul.mubr.bf16.gmra.mrb[0].mxu0 %v709
        %v745 = vpop.f32.mrb[0].mxu0
        %v746 = vadd.f32 %v707, %v745
        %v747 = vpop.f32.mrb[0].mxu0
        %v748 = vpop.f32.mrb[0].mxu0
        %v749 = vpop.f32.mrb[0].mxu0
        %750 = vdwg.mxu0
        %751 = vst [vmem:[%s369] sm:$0x1] %v746
        %s752 = sand.u32 %s227, 1
        %s753 = scalar_lea.sflag [#allocation5], %s752
        %s754 = sand.u32 %s227, 1
        %s755 = scalar_lea.vmem [#allocation4], %s754
        // Predicated region
        $region95: #{tpu_custom_call.1} parent=89 // pred_check
          %p756 = pneg %p237
        $region96: #{tpu_custom_call.1} parent=89 // pred_check_branch
          %758 = sbr.rel (%p756) target = $region98
        $region97: #{tpu_custom_call.1} parent=89 // pred_region
          %s760 = ssub.s32 16, 16
          %761 = vsyncadd %s753, %s760
          %s762 = smul.addr %s25, 16
          %s763 = scalar_lea.hbm %s9, %s762
          %s765 = sshll.u32 %s755, 4
          %s766 = int_to_ptr.vmem [resolvable:$true] %s765
          %768 = dma.vmem_to_hbm [thread:$0]  %s766, 16, %s763, %s753
        $region98: #{tpu_custom_call.1} parent=89 // pred_fallthru
          _
      $region90: #{tpu_custom_call.1} parent=5 // pred_fallthru
        _
      %p769 = scmp.le.s32.totalorder 2, %s20
      // Predicated region
      $region99: #{tpu_custom_call.1} parent=5 // pred_check
        %p770 = pneg %p769
      $region100: #{tpu_custom_call.1} parent=5 // pred_check_branch
        %772 = sbr.rel (%p770) target = $region102
      $region101: #{tpu_custom_call.1} parent=5 // pred_region
        %s773 = ssub.s32 %s20, 2
        // Predicated region
        $region103: #{tpu_custom_call.1} parent=101 // pred_check
          %p774 = pneg %p243
        $region104: #{tpu_custom_call.1} parent=101 // pred_check_branch
          %776 = sbr.rel (%p774) target = $region106
        $region105: #{tpu_custom_call.1} parent=101 // pred_region
          %s777 = sand.u32 %s228, 1
          %s778 = scalar_lea.sflag [#allocation5], %s777
          %s779 = sand.u32 %s228, 1
          %s780 = scalar_lea.vmem [#allocation4], %s779
          %781 = dma.done %s778, 16
        $region106: #{tpu_custom_call.1} parent=101 // pred_fallthru
          _
      $region102: #{tpu_custom_call.1} parent=5 // pred_fallthru
        _
    $region6: #{tpu_custom_call.1} parent=1 // loop_footer
      %s24 = sadd.s32 1, %s20
    $region7: #{tpu_custom_call.1} parent=1 // loop_footer_branch
      %19 = sbr.rel target = $region3
    $region8: #{tpu_custom_call.1} parent=1 // loop_exit
      _
    %782 = vsyncpa [#allocation5], 1
    %s783 = scalar_lea.sflag [#allocation5], 1
    %784 = vsyncpa %s783, 1

</llo_original>
